<compile_context>
chip_gen: v7x
topology: tpu7x:2x2x1
jax: 0.10.0
libtpu: 0.0.40
codegen_flags: <defaults>
</compile_context>

<pallas_src>
import jax
import jax.numpy as jnp
from jax.experimental import pallas as pl
from jax.experimental.pallas import tpu as pltpu


def _dds_kernel(x_ref, w_ref, b_ref, o_ref):
    # x_ref: (C_in, T) f32 streamed tile of one batch's spatial columns
    # w_ref: (C_out, C_in) bf16, folded w2@w1, resident
    # b_ref: (C_out, 1)  f32, folded w2@b1+b2, resident
    # o_ref: (C_out, T)
    x = x_ref[...].astype(jnp.bfloat16)  # single-pass MXU operands
    y = jnp.dot(w_ref[...], x, preferred_element_type=jnp.float32) + b_ref[...]
    o_ref[...] = jax.nn.sigmoid(y).astype(o_ref.dtype)


def _pick_hw_tile(hw, batch, c_in, c_out, *, t_cap=2048, budget_bytes=16 << 20):
    """Column tile for the flattened spatial axis.

    Multiple of 128 (lane-dense), capped so that (a) double-buffered streamed
    in/out plus in-kernel temporaries fit well inside scoped VMEM on every TPU
    generation (incl. v7x's 64 MiB), (b) T <= ~2K columns (HBM roofline is
    flat beyond that), and (c) the grid keeps >= 2 steps when possible so both
    v7x TensorCores get work.
    """
    hw128 = pl.cdiv(hw, 128) * 128
    # Per-column bytes: f32 x-in + y-out (double-buffered) + bf16 x cast + f32 logits.
    per_col = 4 * 2 * (c_in + c_out) + 2 * c_in + 4 * c_out
    t = min(t_cap, hw128, max(128, (budget_bytes // per_col) // 128 * 128))
    while batch * pl.cdiv(hw, t) < 2 and t > 128:
        t = max(128, (t // 2) // 128 * 128)
    return t


def deep_dense_supervision_forward(inputs, w1, b1, w2, b2, ds=1):
    """Forward pass of Deep_dense_supervision.

    inputs : sequence of NCHW tensors; the module uses inputs[ds-1].
    w1 : (C_mid, C_in)   1x1 conv weight   b1 : (C_mid,)
    w2 : (C_out, C_mid)  1x1 conv weight   b2 : (C_out,)
    Returns sigmoid(conv1x1(w2, conv1x1(w1, x) + b1) + b2), shape (B, C_out, H, W).
    """
    x = inputs[ds - 1]
    B, C_in, H, W = x.shape
    C_mid, C_in_w = w1.shape
    C_out, C_mid_w = w2.shape
    assert C_in_w == C_in and C_mid_w == C_mid

    # Fold the two 1x1 convs into one (tiny trace-time matmuls, f32 HIGHEST).
    w1f = w1.astype(jnp.float32)
    w2f = w2.astype(jnp.float32)
    w_folded = jnp.dot(w2f, w1f, precision=jax.lax.Precision.HIGHEST)       # (C_out, C_in)
    b_folded = (
        jnp.dot(w2f, b1.astype(jnp.float32).reshape(C_mid, 1),
                precision=jax.lax.Precision.HIGHEST)
        + b2.astype(jnp.float32).reshape(C_out, 1)
    )                                                                        # (C_out, 1)

    HW = H * W
    x3 = x.reshape(B, C_in, HW)

    T = _pick_hw_tile(HW, B, C_in, C_out)
    n_col_blocks = pl.cdiv(HW, T)
    HW_pad = n_col_blocks * T
    if HW_pad != HW:
        x3 = jnp.pad(x3, ((0, 0), (0, 0), (0, HW_pad - HW)))

    grid = (B, n_col_blocks)

    cost = pl.CostEstimate(
        flops=2 * B * HW_pad * C_out * C_in,
        transcendentals=B * HW_pad * C_out,
        bytes_accessed=(C_in + C_out) * 4 * B * HW_pad,
    )

    y3 = pl.pallas_call(
        _dds_kernel,
        out_shape=jax.ShapeDtypeStruct((B, C_out, HW_pad), x.dtype),
        grid=grid,
        in_specs=[
            pl.BlockSpec((None, C_in, T), lambda b, j: (b, 0, j)),   # x: streamed
            pl.BlockSpec((C_out, C_in), lambda b, j: (0, 0)),        # folded W: resident
            pl.BlockSpec((C_out, 1), lambda b, j: (0, 0)),           # folded b: resident
        ],
        out_specs=pl.BlockSpec((None, C_out, T), lambda b, j: (b, 0, j)),
        compiler_params=pltpu.CompilerParams(
            dimension_semantics=("parallel", "parallel"),
            vmem_limit_bytes=32 * 1024 * 1024,
        ),
        cost_estimate=cost,
    )(x3, w_folded.astype(jnp.bfloat16), b_folded)

    return y3[:, :, :HW].reshape(B, C_out, H, W)


def _ref_forward(x, w1, b1, w2, b2):
    """Module-faithful pure-JAX reference (two f32 1x1 convs, HIGHEST precision)."""
    h = jnp.einsum("mc,bchw->bmhw", w1, x, precision=jax.lax.Precision.HIGHEST)
    h = h + b1.reshape(1, -1, 1, 1)
    y = jnp.einsum("om,bmhw->bohw", w2, h, precision=jax.lax.Precision.HIGHEST)
    y = y + b2.reshape(1, -1, 1, 1)
    return jax.nn.sigmoid(y)


if __name__ == "__main__":
    key = jax.random.PRNGKey(0)
    kx, kw1, kb1, kw2, kb2, kx2 = jax.random.split(key, 6)

    # Shapes implied by the module defaults: in=48, mid=54, out=2*2*2=8.
    B, C_in, C_mid, C_out, H, W = 2, 48, 54, 8, 16, 16

    x = jax.random.normal(kx, (B, C_in, H, W), dtype=jnp.float32)
    # Kaiming-like scaled random weights (exact init values irrelevant for fwd check).
    w1 = jax.random.normal(kw1, (C_mid, C_in), dtype=jnp.float32) * (2.0 / C_in) ** 0.5
    b1 = jax.random.normal(kb1, (C_mid,), dtype=jnp.float32) * 0.1
    w2 = jax.random.normal(kw2, (C_out, C_mid), dtype=jnp.float32) * (2.0 / C_mid) ** 0.5
    b2 = jax.random.normal(kb2, (C_out,), dtype=jnp.float32) * 0.1

    y = deep_dense_supervision_forward([x], w1, b1, w2, b2, ds=1)
    y = jax.block_until_ready(y)
    y_ref = _ref_forward(x, w1, b1, w2, b2)
    assert y.shape == (B, C_out, H, W)
    # bf16 MXU operands + folded weights: loosened tolerance vs f32 reference.
    assert jnp.allclose(y, y_ref, atol=3e-2, rtol=3e-2), "mismatch vs reference"

    # Ragged spatial size (HW not a multiple of 128) exercises the cdiv+pad path.
    H2 = W2 = 10
    x2 = jax.random.normal(kx2, (B, C_in, H2, W2), dtype=jnp.float32)
    y2 = deep_dense_supervision_forward([x2], w1, b1, w2, b2, ds=1)
    y2 = jax.block_until_ready(y2)
    y2_ref = _ref_forward(x2, w1, b1, w2, b2)
    assert y2.shape == (B, C_out, H2, W2)
    assert jnp.allclose(y2, y2_ref, atol=3e-2, rtol=3e-2), "mismatch vs reference (ragged)"

    print("KERNEL_OK")
</pallas_src>

<mosaic_0001>
module attributes {stable_mosaic.version = 11 : i64} {
  func.func @_dds_kernel(%arg0: i32, %arg1: i32, %arg2: memref<1x48x256xf32, #tpu.memory_space<vmem>>, %arg3: memref<8x48xbf16, #tpu.memory_space<vmem>>, %arg4: memref<8x1xf32, #tpu.memory_space<vmem>>, %arg5: memref<1x8x256xf32, #tpu.memory_space<vmem>>) attributes {dimension_semantics = [#tpu.dimension_semantics<parallel>, #tpu.dimension_semantics<parallel>], iteration_bounds = array<i64: 2, 1>, scalar_prefetch = 0 : i64, scratch_operands = 0 : i64, tpu.core_type = #tpu.core_type<tc>, window_params = [{transform_indices = @transform_0, window_bounds = array<i64: 1, 48, 256>}, {pipeline_mode = #tpu.pipeline_mode<synchronous>, transform_indices = @transform_1, window_bounds = array<i64: 8, 48>}, {pipeline_mode = #tpu.pipeline_mode<synchronous>, transform_indices = @transform_2, window_bounds = array<i64: 8, 1>}, {transform_indices = @transform_3, window_bounds = array<i64: 1, 8, 256>}]} {
    %c0 = arith.constant 0 : index
    %c0_0 = arith.constant 0 : index
    %c0_1 = arith.constant 0 : index
    %0 = vector.load %arg2[%c0, %c0_0, %c0_1] : memref<1x48x256xf32, #tpu.memory_space<vmem>>, vector<1x48x256xf32>
    %1 = vector.shape_cast %0 : vector<1x48x256xf32> to vector<48x256xf32>
    %2 = arith.truncf %1 : vector<48x256xf32> to vector<48x256xbf16>
    %c0_2 = arith.constant 0 : index
    %c0_3 = arith.constant 0 : index
    %3 = vector.load %arg3[%c0_2, %c0_3] : memref<8x48xbf16, #tpu.memory_space<vmem>>, vector<8x48xbf16>
    %cst = arith.constant dense<0.000000e+00> : vector<8x256xf32>
    %4 = tpu.matmul %3, %2, %cst {dimension_numbers = #tpu.dot_dimension_numbers<[1], [0], [0], [1], [0, 0, 1, 1], [], []>} : vector<8x48xbf16>, vector<48x256xbf16>, vector<8x256xf32> -> vector<8x256xf32>
    %c0_4 = arith.constant 0 : index
    %c0_5 = arith.constant 0 : index
    %5 = vector.load %arg4[%c0_4, %c0_5] : memref<8x1xf32, #tpu.memory_space<vmem>>, vector<8x1xf32>
    %6 = vector.broadcast %5 : vector<8x1xf32> to vector<8x256xf32>
    %7 = arith.addf %4, %6 : vector<8x256xf32>
    %8 = arith.negf %7 : vector<8x256xf32>
    %9 = math.exp %8 : vector<8x256xf32>
    %cst_6 = arith.constant 1.000000e+00 : f32
    %10 = vector.broadcast %cst_6 : f32 to vector<8x256xf32>
    %11 = arith.addf %10, %9 : vector<8x256xf32>
    %12 = arith.divf %10, %11 : vector<8x256xf32>
    %c0_7 = arith.constant 0 : index
    %c0_8 = arith.constant 0 : index
    %c0_9 = arith.constant 0 : index
    %13 = vector.load %arg5[%c0_7, %c0_8, %c0_9] : memref<1x8x256xf32, #tpu.memory_space<vmem>>, vector<1x8x256xf32>
    %14 = vector.shape_cast %13 : vector<1x8x256xf32> to vector<8x256xf32>
    %15 = vector.shape_cast %12 : vector<8x256xf32> to vector<1x8x256xf32>
    tpu.vector_store %arg5[%c0_7, %c0_8, %c0_9], %15 {strides = array<i32>} : memref<1x8x256xf32, #tpu.memory_space<vmem>>, vector<1x8x256xf32>,
    return
  }
  func.func @transform_0(%arg0: i32, %arg1: i32) -> (i32, i32, i32) {
    %c0_i32 = arith.constant 0 : i32
    %c0_i32_0 = arith.constant 0 : i32
    return %arg0, %c0_i32, %arg1 : i32, i32, i32
  }
  func.func @transform_1(%arg0: i32, %arg1: i32) -> (i32, i32) {
    %c0_i32 = arith.constant 0 : i32
    %c0_i32_0 = arith.constant 0 : i32
    %c0_i32_1 = arith.constant 0 : i32
    return %c0_i32, %c0_i32_0 : i32, i32
  }
  func.func @transform_2(%arg0: i32, %arg1: i32) -> (i32, i32) {
    %c0_i32 = arith.constant 0 : i32
    %c0_i32_0 = arith.constant 0 : i32
    %c0_i32_1 = arith.constant 0 : i32
    return %c0_i32, %c0_i32_0 : i32, i32
  }
  func.func @transform_3(%arg0: i32, %arg1: i32) -> (i32, i32, i32) {
    %c0_i32 = arith.constant 0 : i32
    %c0_i32_0 = arith.constant 0 : i32
    return %arg0, %c0_i32, %arg1 : i32, i32, i32
  }
}

</mosaic_0001>

<llo_original>
// kernel: tpu_custom_call.1
$region0: #{tpu_custom_call.1}
  #allocation0 [shape = 'u32[]', space=smem, size = 0x4, offset = 0x4, fixed_abs, tag = 'smem constant byte address 0x4 - core index']
  #allocation1 [shape = 'u32[144,128]{1,0:T(1,128)}', space=vmem, size = 0x12000, scoped, tag = 'internal scratch']
  %s0 = inlined_call_operand.hbm [shape: f32[2,48,256], index: 0, kind: input, shape index: {}]
  %s1 = inlined_call_operand.vmem [shape: bf16[8,48], index: 1, kind: input, shape index: {}]
  %s2 = inlined_call_operand.vmem [shape: f32[8,1], index: 2, kind: input, shape index: {}]
  %s3 = inlined_call_operand.hbm [shape: f32[2,8,256], index: 3, kind: output, shape index: {}]
  %s4 = sld [smem:[#allocation0]]
  $region49: #{tpu_custom_call.1} parent=0
    _
  %s6 = ssub.s32 1, %s4
  %s7 = scalar_select 0, %s6, %s4
  $region1: #{tpu_custom_call.1} parent=0
    #allocation2 [shape = 'u8[98304]{0}', space=vmem, size = 0x18000, scoped, tag = 'input window, operand 0']
    #allocation3 [shape = 's32[2]{0}', space=sflag, size = 0x8, scoped, tag = 'scoped memory for tpu_custom_call.1']
    #allocation4 [shape = 's32[2]{0}', space=sflag, size = 0x8, scoped, tag = 'scoped memory for tpu_custom_call.1']
    #allocation5 [shape = 'u8[16384]{0}', space=vmem, size = 0x4000, scoped, tag = 'output window, operand 0']
    %8 = vsyncpa [#allocation3], 0
    %s9 = scalar_lea.sflag [#allocation3], 1
    %10 = vsyncpa %s9, 0
    %11 = vsyncpa [#allocation4], 0
    %s12 = scalar_lea.sflag [#allocation4], 1
    %13 = vsyncpa %s12, 0
    loop: start=0, step=1, limit=4
    $region2: #{tpu_custom_call.1} parent=1 // loop_pre_header
      _
    $region3: #{tpu_custom_call.1} parent=1 // loop_header
      %s15 = sphi 0, %s19
      %p16 = scmp.ge.s32.totalorder %s15, 4
      %s22 = sphi 0, %s34
      %s23 = sphi 0, %s30
      %s24 = sphi 0, %s22
      %s25 = sphi 0, %s23
      %s26 = sphi 0, %s24
      %s27 = sphi 0, %s25
      %s39 = sphi 0, %s41
      %s42 = sphi 0, %s39
      %s43 = sphi 0, %s42
      %s59 = sphi 0, %s43
      %s63 = sphi 0, %s63
      %s65 = sphi 0, %s63
      %s66 = sphi 0, %s65
      %s80 = sphi 0, %s66
      %s84 = sphi 0, %s84
      %s86 = sphi 0, %s84
      %s87 = sphi 0, %s86
      %s101 = sphi 0, %s87
      %s109 = sphi 0, %s111
      %s112 = sphi 0, %s109
      %s113 = sphi 0, %s112
      %s129 = sphi 0, %s113
    $region4: #{tpu_custom_call.1} parent=1 // loop_header_branch
      %18 = sbr.rel (%p16) target = $region8
    $region5: #{tpu_custom_call.1} parent=1 // loop_body
      %s20 = ssub.s32 %s15, 1
      %s21 = ssub.s32 %s15, 2
      %s28 = sadd.s32 1, %s23
      %p29 = scmp.ge.s32.totalorder %s28, 1
      %s30 = scalar_select %p29, 0, %s28
      %s31 = sadd.s32 1, %s22
      %s32 = scalar_select %p29, %s31, %s22
      %p33 = scmp.ge.s32.totalorder %s32, 2
      %s34 = scalar_select %p33, 0, %s32
      %s35 = ssub.s32 %s22, %s34
      %s36 = ssub.s32 %s23, %s30
      %s37 = sor.u32 %s35, %s36
      %p38 = scmp.eq.s32.totalorder %s37, 0
      %s40 = sadd.s32 %s39, 1
      %s41 = scalar_select %p38, %s39, %s40
      %p44 = pneg %p38
      %p45 = scmp.eq.s32.totalorder %s15, 1
      %p46 = por %p44, %p45
      %p47 = scmp.ne.s32.totalorder %s39, %s42
      %p48 = scmp.eq.s32.totalorder %s15, 0
      %p49 = por %p47, %p48
      %p50 = scmp.ne.s32.totalorder %s39, %s42
      %p51 = scmp.eq.s32.totalorder %s20, 1
      %p52 = por %p50, %p51
      %p53 = scmp.ne.s32.totalorder %s42, %s43
      %p54 = scmp.eq.s32.totalorder %s20, 0
      %p55 = por %p53, %p54
      %p56 = scmp.ne.s32.totalorder %s42, %s43
      %p57 = scmp.eq.s32.totalorder %s21, 1
      %p58 = por %p56, %p57
      %p60 = scmp.ne.s32.totalorder %s43, %s59
      %p61 = scmp.eq.s32.totalorder %s21, 0
      %p62 = por %p60, %p61
      %s64 = sadd.s32 %s63, 1
      %p67 = scmp.eq.s32.totalorder %s15, 1
      %p68 = scmp.ne.s32.totalorder %s63, %s65
      %p69 = scmp.eq.s32.totalorder %s15, 0
      %p70 = por %p68, %p69
      %p71 = scmp.ne.s32.totalorder %s63, %s65
      %p72 = scmp.eq.s32.totalorder %s20, 1
      %p73 = por %p71, %p72
      %p74 = scmp.ne.s32.totalorder %s65, %s66
      %p75 = scmp.eq.s32.totalorder %s20, 0
      %p76 = por %p74, %p75
      %p77 = scmp.ne.s32.totalorder %s65, %s66
      %p78 = scmp.eq.s32.totalorder %s21, 1
      %p79 = por %p77, %p78
      %p81 = scmp.ne.s32.totalorder %s66, %s80
      %p82 = scmp.eq.s32.totalorder %s21, 0
      %p83 = por %p81, %p82
      %s85 = sadd.s32 %s84, 1
      %p88 = scmp.eq.s32.totalorder %s15, 1
      %p89 = scmp.ne.s32.totalorder %s84, %s86
      %p90 = scmp.eq.s32.totalorder %s15, 0
      %p91 = por %p89, %p90
      %p92 = scmp.ne.s32.totalorder %s84, %s86
      %p93 = scmp.eq.s32.totalorder %s20, 1
      %p94 = por %p92, %p93
      %p95 = scmp.ne.s32.totalorder %s86, %s87
      %p96 = scmp.eq.s32.totalorder %s20, 0
      %p97 = por %p95, %p96
      %p98 = scmp.ne.s32.totalorder %s86, %s87
      %p99 = scmp.eq.s32.totalorder %s21, 1
      %p100 = por %p98, %p99
      %p102 = scmp.ne.s32.totalorder %s87, %s101
      %p103 = scmp.eq.s32.totalorder %s21, 0
      %p104 = por %p102, %p103
      %s105 = ssub.s32 %s22, %s34
      %s106 = ssub.s32 %s23, %s30
      %s107 = sor.u32 %s105, %s106
      %p108 = scmp.eq.s32.totalorder %s107, 0
      %s110 = sadd.s32 %s109, 1
      %s111 = scalar_select %p108, %s109, %s110
      %p114 = pneg %p108
      %p115 = scmp.eq.s32.totalorder %s15, 1
      %p116 = por %p114, %p115
      %p117 = scmp.ne.s32.totalorder %s109, %s112
      %p118 = scmp.eq.s32.totalorder %s15, 0
      %p119 = por %p117, %p118
      %p120 = scmp.ne.s32.totalorder %s109, %s112
      %p121 = scmp.eq.s32.totalorder %s20, 1
      %p122 = por %p120, %p121
      %p123 = scmp.ne.s32.totalorder %s112, %s113
      %p124 = scmp.eq.s32.totalorder %s20, 0
      %p125 = por %p123, %p124
      %p126 = scmp.ne.s32.totalorder %s112, %s113
      %p127 = scmp.eq.s32.totalorder %s21, 1
      %p128 = por %p126, %p127
      %p130 = scmp.ne.s32.totalorder %s113, %s129
      %p131 = scmp.eq.s32.totalorder %s21, 0
      %p132 = por %p130, %p131
      %p133 = scmp.le.s32.totalorder 1, %s15
      %p134 = scmp.lt.s32.totalorder %s15, 3
      %p135 = pnand %p133, %p134
      %p136 = pneg %p135
      // Predicated region
      $region9: #{tpu_custom_call.1} parent=5 // pred_check
        _
      $region10: #{tpu_custom_call.1} parent=5 // pred_check_branch
        %138 = sbr.rel (%p135) target = $region12
      $region11: #{tpu_custom_call.1} parent=5 // pred_region
        %s139 = ssub.s32 %s15, 1
        // Predicated region
        $region13: #{tpu_custom_call.1} parent=11 // pred_check
          %p140 = pneg %p76
        $region14: #{tpu_custom_call.1} parent=11 // pred_check_branch
          %142 = sbr.rel (%p140) target = $region16
        $region15: #{tpu_custom_call.1} parent=11 // pred_region
          _
        $region16: #{tpu_custom_call.1} parent=11 // pred_fallthru
          _
        // Predicated region
        $region17: #{tpu_custom_call.1} parent=11 // pred_check
          %p143 = pneg %p97
        $region18: #{tpu_custom_call.1} parent=11 // pred_check_branch
          %145 = sbr.rel (%p143) target = $region20
        $region19: #{tpu_custom_call.1} parent=11 // pred_region
          _
        $region20: #{tpu_custom_call.1} parent=11 // pred_fallthru
          _
      $region12: #{tpu_custom_call.1} parent=5 // pred_fallthru
        _
      %p146 = scmp.lt.s32.totalorder %s15, 2
      // Predicated region
      $region21: #{tpu_custom_call.1} parent=5 // pred_check
        %p147 = pneg %p146
      $region22: #{tpu_custom_call.1} parent=5 // pred_check_branch
        %149 = sbr.rel (%p147) target = $region24
      $region23: #{tpu_custom_call.1} parent=5 // pred_region
        // Predicated region
        $region25: #{tpu_custom_call.1} parent=23 // pred_check
          %p150 = pneg %p49
        $region26: #{tpu_custom_call.1} parent=23 // pred_check_branch
          %152 = sbr.rel (%p150) target = $region28
        $region27: #{tpu_custom_call.1} parent=23 // pred_region
          %s153 = sand.u32 %s39, 1
          %s154 = scalar_lea.sflag [#allocation3], %s153
          %s155 = sand.u32 %s39, 1
          %s156 = smul.addr %s155, 96
          %s157 = scalar_lea.vmem [#allocation2], %s156
          %s158 = smul.u32 2, %s23
          %s160 = ssub.s32 1536, 1536
          %161 = vsyncadd %s154, %s160
          %s162 = smul.addr %s22, 12
          %s163 = sadd.s32 %s158, %s162
          %s164 = smul.addr %s163, 128
          %s165 = scalar_lea.hbm %s0, %s164
          %s166 = sshll.u32 %s157, 4
          %s167 = int_to_ptr.vmem [resolvable:$true] %s166
          %172 = dma.hbm_to_vmem [thread:$0]  %s165, 1536, %s167, %s154, 256, 256, 16
        $region28: #{tpu_custom_call.1} parent=23 // pred_fallthru
          _
      $region24: #{tpu_custom_call.1} parent=5 // pred_fallthru
        _
      %p173 = scmp.le.s32.totalorder 1, %s15
      %p174 = scmp.lt.s32.totalorder %s15, 3
      %p175 = pnand %p173, %p174
      %p176 = pneg %p175
      // Predicated region
      $region29: #{tpu_custom_call.1} parent=5 // pred_check
        _
      $region30: #{tpu_custom_call.1} parent=5 // pred_check_branch
        %178 = sbr.rel (%p175) target = $region32
      $region31: #{tpu_custom_call.1} parent=5 // pred_region
        %s179 = ssub.s32 %s15, 1
        %s180 = sand.u32 %s42, 1
        %s181 = scalar_lea.sflag [#allocation3], %s180
        %s182 = sand.u32 %s42, 1
        %s183 = smul.addr %s182, 96
        %s184 = scalar_lea.vmem [#allocation2], %s183
        // Predicated region
        $region33: #{tpu_custom_call.1} parent=31 // pred_check
          %p185 = pneg %p55
        $region34: #{tpu_custom_call.1} parent=31 // pred_check_branch
          %187 = sbr.rel (%p185) target = $region36
        $region35: #{tpu_custom_call.1} parent=31 // pred_region
          %188 = dma.done %s181, 1536
        $region36: #{tpu_custom_call.1} parent=31 // pred_fallthru
          _
        %s189 = sand.u32 %s42, 1
        %s190 = scalar_lea.sflag [#allocation3], %s189
        %s191 = sand.u32 %s42, 1
        %s192 = smul.addr %s191, 96
        %s193 = scalar_lea.vmem [#allocation2], %s192
        %p194 = pneg %p55
        %p195 = pneg %p52
        %p196 = pneg %p76
        %p197 = pneg %p73
        %p198 = pneg %p97
        %p199 = pneg %p94
        %p200 = pneg %p125
        %p201 = pneg %p122
        %s202 = sand.u32 %s112, 1
        %s203 = scalar_lea.sflag [#allocation4], %s202
        %s204 = sand.u32 %s112, 1
        %s205 = smul.addr %s204, 16
        %s206 = scalar_lea.vmem [#allocation5], %s205
        %s207 = smul.u32 2, %s25
        %s208 = smul.u32 2, %s25
        %v210 = vld [vmem:[%s184] sm:$0xff]
        %v211 = vld [vmem:[%s184 + $0x8] sm:$0xff]
        %v212 = vld [vmem:[%s184 + $0x10] sm:$0xff]
        %v213 = vld [vmem:[%s184 + $0x18] sm:$0xff]
        %v214 = vld [vmem:[%s184 + $0x20] sm:$0xff]
        %v215 = vld [vmem:[%s184 + $0x28] sm:$0xff]
        %v216 = vld [vmem:[%s184 + $0x30] sm:$0xff]
        %v217 = vld [vmem:[%s184 + $0x38] sm:$0xff]
        %v218 = vld [vmem:[%s184 + $0x40] sm:$0xff]
        %v219 = vld [vmem:[%s184 + $0x48] sm:$0xff]
        %v220 = vld [vmem:[%s184 + $0x50] sm:$0xff]
        %v221 = vld [vmem:[%s184 + $0x58] sm:$0xff]
        %v222 = vpack.c.bf16 %v212, %v210
        %v223 = vpack.c.bf16 %v213, %v211
        %v224 = vpack.c.bf16 %v216, %v214
        %v225 = vpack.c.bf16 %v217, %v215
        %v226 = vpack.c.bf16 %v220, %v218
        %v227 = vpack.c.bf16 %v221, %v219
        %v228 = vld [vmem:[%s1] sm:$0xf]
        %v229 = vld [vmem:[%s2] sm:$0xff]
        %231 = vset.pattern.permute.xlu0 0
        %232 = vperm.xlu0 %231, %v229
        %v233 = vpop.permute.xlu0 %232
        %vm235 = vcmask 392192
        %v237 = vsel %vm235, %v228, 0
        %239 = vmatprep.subr.bf16.mxu0 %v223
        %240 = vmatpush1.bf16.msra.mxu0 %v222
        %241 = vmatprep.subr.bf16.mxu0 %v225
        %242 = vmatpush1.bf16.msra.mxu0 %v224
        %243 = vmatprep.subr.bf16.mxu0 %v227
        %244 = vmatpush1.bf16.msra.mxu0 %v226
        %245 = vmatprep.subr.bf16.mxu0 0
        %246 = vmatpush1.bf16.msra.mxu0 0
        %247 = vmatprep.subr.bf16.mxu0 0
        %248 = vmatpush1.bf16.msra.mxu0 0
        %249 = vmatprep.subr.bf16.mxu0 0
        %250 = vmatpush1.bf16.msra.mxu0 0
        %251 = vmatprep.subr.bf16.mxu0 0
        %252 = vmatpush1.bf16.msra.mxu0 0
        %253 = vmatprep.subr.bf16.mxu0 0
        %254 = vmatpush1.bf16.msra.mxu0 0
        %255 = vmatprep.subr.bf16.mxu0 0
        %256 = vmatpush1.bf16.msra.mxu0 0
        %257 = vmatprep.subr.bf16.mxu0 0
        %258 = vmatpush1.bf16.msra.mxu0 0
        %259 = vmatprep.subr.bf16.mxu0 0
        %260 = vmatpush1.bf16.msra.mxu0 0
        %261 = vmatprep.subr.bf16.mxu0 0
        %262 = vmatpush1.bf16.msra.mxu0 0
        %263 = vmatprep.subr.bf16.mxu0 0
        %264 = vmatpush1.bf16.msra.mxu0 0
        %265 = vmatprep.subr.bf16.mxu0 0
        %266 = vmatpush1.bf16.msra.mxu0 0
        %267 = vmatprep.subr.bf16.mxu0 0
        %268 = vmatpush1.bf16.msra.mxu0 0
        %269 = vmatprep.subr.bf16.mxu0 0
        %270 = vmatpush1.bf16.msra.mxu0 0
        %271 = vmatprep.mubr.bf16.mxu0 0
        %272 = vmatmul.mubr.bf16.gmra.mrb[0].mxu0 %v237
        %v273 = vpop.f32.mrb[0].mxu0
        %v274 = vadd.f32 %v233, %v273
        %v275 = vpop.f32.mrb[0].mxu0
        %v276 = vadd.f32 %v233, %v275
        %v277 = vpop.f32.mrb[0].mxu0
        %v278 = vpop.f32.mrb[0].mxu0
        %279 = vdwg.mxu0
        %v280 = vxor.u32 %v274, 2147483648
        %v281 = vxor.u32 %v276, 2147483648
        %v282 = vmul.f32 %v280, 1.442695
        %v283 = vpow.pop %v282
        %v284 = vmul.f32 %v281, 1.442695
        %v285 = vpow.pop %v284
        %v286 = vadd.f32 %v283, 1.0
        %v287 = vadd.f32 %v285, 1.0
        %v288 = vrcp.pop %v286
        %v289 = vmul.f32 1.0, %v288
        %v290 = vrcp.pop %v287
        %v291 = vmul.f32 1.0, %v290
        %292 = vst [vmem:[%s206] sm:$0xff] %v289
        %293 = vst [vmem:[%s206 + $0x8] sm:$0xff] %v291
        %s294 = sand.u32 %s112, 1
        %s295 = scalar_lea.sflag [#allocation4], %s294
        %s296 = sand.u32 %s112, 1
        %s297 = smul.addr %s296, 16
        %s298 = scalar_lea.vmem [#allocation5], %s297
        // Predicated region
        $region37: #{tpu_custom_call.1} parent=31 // pred_check
          %p299 = pneg %p122
        $region38: #{tpu_custom_call.1} parent=31 // pred_check_branch
          %301 = sbr.rel (%p299) target = $region40
        $region39: #{tpu_custom_call.1} parent=31 // pred_region
          %s302 = smul.u32 2, %s25
          %s304 = ssub.s32 256, 256
          %305 = vsyncadd %s295, %s304
          %s306 = smul.addr %s24, 2
          %s307 = sadd.s32 %s302, %s306
          %s308 = smul.addr %s307, 128
          %s309 = scalar_lea.hbm %s3, %s308
          %s311 = sshll.u32 %s298, 4
          %s312 = int_to_ptr.vmem [resolvable:$true] %s311
          %314 = dma.vmem_to_hbm [thread:$0]  %s312, 256, %s309, %s295
        $region40: #{tpu_custom_call.1} parent=31 // pred_fallthru
          _
      $region32: #{tpu_custom_call.1} parent=5 // pred_fallthru
        _
      %p315 = scmp.le.s32.totalorder 2, %s15
      // Predicated region
      $region41: #{tpu_custom_call.1} parent=5 // pred_check
        %p316 = pneg %p315
      $region42: #{tpu_custom_call.1} parent=5 // pred_check_branch
        %318 = sbr.rel (%p316) target = $region44
      $region43: #{tpu_custom_call.1} parent=5 // pred_region
        %s319 = ssub.s32 %s15, 2
        // Predicated region
        $region45: #{tpu_custom_call.1} parent=43 // pred_check
          %p320 = pneg %p128
        $region46: #{tpu_custom_call.1} parent=43 // pred_check_branch
          %322 = sbr.rel (%p320) target = $region48
        $region47: #{tpu_custom_call.1} parent=43 // pred_region
          %s323 = sand.u32 %s113, 1
          %s324 = scalar_lea.sflag [#allocation4], %s323
          %s325 = sand.u32 %s113, 1
          %s326 = smul.addr %s325, 16
          %s327 = scalar_lea.vmem [#allocation5], %s326
          %328 = dma.done %s324, 256
        $region48: #{tpu_custom_call.1} parent=43 // pred_fallthru
          _
      $region44: #{tpu_custom_call.1} parent=5 // pred_fallthru
        _
    $region6: #{tpu_custom_call.1} parent=1 // loop_footer
      %s19 = sadd.s32 1, %s15
    $region7: #{tpu_custom_call.1} parent=1 // loop_footer_branch
      %14 = sbr.rel target = $region3
    $region8: #{tpu_custom_call.1} parent=1 // loop_exit
      _
    %329 = vsyncpa [#allocation3], 1
    %s330 = scalar_lea.sflag [#allocation3], 1
    %331 = vsyncpa %s330, 1
    %332 = vsyncpa [#allocation4], 1
    %s333 = scalar_lea.sflag [#allocation4], 1
    %334 = vsyncpa %s333, 1

</llo_original>
